<compile_context>
chip_gen: v7x
topology: tpu7x:2x2x1
jax: 0.10.0
libtpu: 0.0.40
codegen_flags: <defaults>
</compile_context>

<pallas_src>
import functools

import jax
import jax.numpy as jnp
from jax import lax
from jax.experimental import pallas as pl
from jax.experimental.pallas import tpu as pltpu


def _round_up(x, m):
    return ((x + m - 1) // m) * m


# ---------------------------------------------------------------------------
# Kernel 1: L2-normalize each row of an embedding table (tiled over rows).
#   emb_out[i, :] = emb[i, :] * rsqrt(sum_d emb[i, d]^2)
# ---------------------------------------------------------------------------
def _normalize_kernel(e_ref, o_ref):
    e = e_ref[...].astype(jnp.float32)
    sumsq = jnp.sum(e * e, axis=1, keepdims=True)
    # rsqrt: single EUP op + VPU multiply; tiny eps guards all-zero rows
    # (documented divergence: torch's emb/norm would produce nan/inf there).
    o_ref[...] = (e * lax.rsqrt(sumsq + 1e-30)).astype(o_ref.dtype)


def normalize_entities(emb, *, vmem_budget_bytes=32 * 1024 * 1024):
    """Row-tiled, HBM-bound full-table L2 normalization."""
    n, d = emb.shape
    bytes_per_row = d * emb.dtype.itemsize
    # 4 live VMEM blocks (double-buffered input + double-buffered output);
    # ~8 MiB blocks at the default budget, well past the measured roofline knee.
    tile_n = max(8, (vmem_budget_bytes // (4 * bytes_per_row)) // 8 * 8)
    if tile_n >= n:
        tile_n = n          # single full block (always a legal block shape)
    grid = (pl.cdiv(n, tile_n),)
    return pl.pallas_call(
        _normalize_kernel,
        out_shape=jax.ShapeDtypeStruct((n, d), emb.dtype),
        grid=grid,
        in_specs=[pl.BlockSpec((tile_n, d), lambda i: (i, 0))],
        out_specs=pl.BlockSpec((tile_n, d), lambda i: (i, 0)),
        # NOTE: no input_output_aliases -- donating the caller's table while
        # other references to it are still live is a correctness hazard.
        compiler_params=pltpu.CompilerParams(
            dimension_semantics=("parallel",),       # rows are independent
            vmem_limit_bytes=48 * 1024 * 1024,       # <= v7x's 64 MiB physical
        ),
    )(emb)


# ---------------------------------------------------------------------------
# Kernel 2: fused gather + TransE triplet score, tiled over the batch with
# double-buffered row gathers.
#   score[b] = -sqrt( sum_d (E[h_b,d] + R[r_b,d] - E[t_b,d])^2 )
# Triplet indices arrive via scalar prefetch (three 1-D SMEM arrays). Entity
# rows are DMA'd straight from the HBM table into VMEM scratch; relation rows
# are gathered from the VMEM-resident relation table. The next tile's gathers
# are issued before computing the current tile (classic P4 prefetch).
# ---------------------------------------------------------------------------
def _score_kernel(h_ids, r_ids, t_ids, ent_hbm, rel_ref, o_ref,
                  h_buf, r_buf, t_buf, sems, *, tile_b):
    i = pl.program_id(0)
    nsteps = pl.num_programs(0)
    slot = i % 2

    def issue_tile(tile_idx, dst_slot):
        """Start the 3*tile_b row gathers for one batch tile into dst_slot."""
        base = tile_idx * tile_b

        def body(j, carry):
            h = h_ids[base + j]
            r = r_ids[base + j]
            t = t_ids[base + j]
            pltpu.make_async_copy(ent_hbm.at[h], h_buf.at[dst_slot, j],
                                  sems.at[dst_slot, 0]).start()
            pltpu.make_async_copy(rel_ref.at[r], r_buf.at[dst_slot, j],
                                  sems.at[dst_slot, 1]).start()
            pltpu.make_async_copy(ent_hbm.at[t], t_buf.at[dst_slot, j],
                                  sems.at[dst_slot, 2]).start()
            return carry

        lax.fori_loop(0, tile_b, body, 0, unroll=4)

    # Pipeline prime: the first grid step issues its own gathers.
    @pl.when(i == 0)
    def _():
        issue_tile(0, 0)

    # Prefetch the next tile's rows into the other slot before computing this
    # one (all tiles' indices are already resident in SMEM via scalar prefetch).
    @pl.when(i + 1 < nsteps)
    def _():
        issue_tile(i + 1, 1 - slot)

    # Drain the current slot. All row copies of one (slot, table) signal the
    # same DMA semaphore; DMA semaphores count bytes, so a single wait sized
    # for the whole (tile_b, d) buffer covers every row copy. The descriptor
    # below is used only for its byte count + semaphore (wait() moves no data).
    pltpu.make_async_copy(h_buf.at[slot], h_buf.at[slot], sems.at[slot, 0]).wait()
    pltpu.make_async_copy(r_buf.at[slot], r_buf.at[slot], sems.at[slot, 1]).wait()
    pltpu.make_async_copy(t_buf.at[slot], t_buf.at[slot], sems.at[slot, 2]).wait()

    diff = (h_buf[slot].astype(jnp.float32)
            + r_buf[slot].astype(jnp.float32)
            - t_buf[slot].astype(jnp.float32))
    sq = jnp.sum(diff * diff, axis=1)              # (tile_b,)
    # Lane-dense 1-D output block (tile_b is a multiple of 128): unmasked vst.
    o_ref[...] = -jnp.sqrt(sq)


def score_hrt_fused(triplets, ent_emb, rel_emb, *, tile_b=256):
    b = triplets.shape[0]
    n_rel, d = rel_emb.shape

    # Lane-dense batch tile: a multiple of 128, no larger than the padded batch.
    tile_b = max(128, (tile_b // 128) * 128)
    tile_b = min(tile_b, _round_up(b, 128))
    b_pad = _round_up(b, tile_b)
    num_tiles = b_pad // tile_b

    trip = triplets.astype(jnp.int32)
    # Three 1-D index arrays (SMEM-friendly). Padded entries reuse index 0
    # (a valid row); their scores are sliced away below.
    h_ids = jnp.zeros((b_pad,), jnp.int32).at[:b].set(trip[:, 0])
    r_ids = jnp.zeros((b_pad,), jnp.int32).at[:b].set(trip[:, 1])
    t_ids = jnp.zeros((b_pad,), jnp.int32).at[:b].set(trip[:, 2])

    kernel = functools.partial(_score_kernel, tile_b=tile_b)
    out = pl.pallas_call(
        kernel,
        out_shape=jax.ShapeDtypeStruct((b_pad,), jnp.float32),
        grid_spec=pltpu.PrefetchScalarGridSpec(
            num_scalar_prefetch=3,                     # h/r/t indices -> SMEM
            grid=(num_tiles,),
            in_specs=[
                # Entity table stays in HBM; rows are gathered by manual DMA.
                pl.BlockSpec(memory_space=pl.ANY),
                # Relation table is small -> VMEM-resident for the whole call
                # (constant block index => fetched from HBM once).
                pl.BlockSpec((n_rel, d), lambda i, h, r, t: (0, 0)),
            ],
            out_specs=pl.BlockSpec((tile_b,), lambda i, h, r, t: (i,)),
            scratch_shapes=[
                pltpu.VMEM((2, tile_b, d), ent_emb.dtype),   # h rows, double buffer
                pltpu.VMEM((2, tile_b, d), rel_emb.dtype),   # r rows, double buffer
                pltpu.VMEM((2, tile_b, d), ent_emb.dtype),   # t rows, double buffer
                pltpu.SemaphoreType.DMA((2, 3)),             # [slot, h/r/t]
            ],
        ),
        compiler_params=pltpu.CompilerParams(
            # Grid steps share the double-buffered scratch + cross-step
            # prefetch chain, so they are NOT independent -> "arbitrary".
            dimension_semantics=("arbitrary",),
        ),
    )(h_ids, r_ids, t_ids, ent_emb, rel_emb)
    return out[:b]


# ---------------------------------------------------------------------------
# Minimal JAX-side "EmbeddingModel" mirroring the PyTorch module's forward().
# ---------------------------------------------------------------------------
class EmbeddingModelPallas:
    def __init__(self, num_entities, num_relations, emb_dim,
                 norm_constraint=True, seed=0, dtype=jnp.float32):
        self.num_entities = num_entities
        self.num_relations = num_relations
        self.emb_dim = emb_dim
        self.norm_constraint = norm_constraint

        # Lane-dense storage: pad hidden dim to a multiple of 128 and relation
        # rows to a multiple of 8. Zero pad columns contribute nothing to the
        # row norm or to ||h + r - t||; padded relation rows are never indexed.
        self._d_pad = _round_up(emb_dim, 128)
        self._nrel_pad = _round_up(num_relations, 8)

        key = jax.random.PRNGKey(seed)
        k_ent, k_rel = jax.random.split(key)
        # xavier_uniform_ (the 'uniform' weight_init branch): U(-a, a),
        # a = sqrt(6 / (fan_in + fan_out)) = sqrt(6 / (num_rows + emb_dim))
        a_e = (6.0 / (num_entities + emb_dim)) ** 0.5
        a_r = (6.0 / (num_relations + emb_dim)) ** 0.5
        ent = jax.random.uniform(k_ent, (num_entities, emb_dim), dtype, -a_e, a_e)
        rel = jax.random.uniform(k_rel, (num_relations, emb_dim), dtype, -a_r, a_r)
        ent = jnp.pad(ent, ((0, 0), (0, self._d_pad - emb_dim)))
        rel = jnp.pad(rel, ((0, self._nrel_pad - num_relations),
                            (0, self._d_pad - emb_dim)))
        # TODO(synk): optionally store tables in bf16 (halves HBM traffic); the
        # kernels already upcast to f32 for compute.
        self.ent_emb = ent
        self.rel_emb = rel
        self._ent_normalized = False

    def mark_params_updated(self):
        """Call after a gradient step so forward() re-applies the norm constraint."""
        self._ent_normalized = False

    def forward(self, triplets, mode=None):
        # 1. norm constraint: L2-normalize the entity table (Pallas kernel 1).
        #    Renormalizing an already unit-norm table is a no-op, so the
        #    HBM-bound full-table pass is skipped unless the weights changed.
        if self.norm_constraint and not self._ent_normalized:
            self.ent_emb = normalize_entities(self.ent_emb)
            self._ent_normalized = True

        if mode is None:
            # 2. fused gather + TransE score (Pallas kernel 2)
            return score_hrt_fused(triplets, self.ent_emb, self.rel_emb)
        # TODO(synk): mode == 'head'/'tail' (score against all entities) is
        # abstract in the base class; implement it as
        # ||h+r||^2 + ||E||^2 - 2 (h+r) E^T with an MXU matmul when needed.
        raise ValueError("Only mode=None (score_hrt) is implemented")


if __name__ == "__main__":
    num_entities, num_relations, emb_dim = 64, 16, 96   # emb_dim pads to 128
    batch = 8

    model = EmbeddingModelPallas(num_entities, num_relations, emb_dim,
                                 norm_constraint=True, seed=0)

    key = jax.random.PRNGKey(0)
    kh, kr, kt = jax.random.split(key, 3)
    heads = jax.random.randint(kh, (batch,), 0, num_entities)
    rels = jax.random.randint(kr, (batch,), 0, num_relations)
    tails = jax.random.randint(kt, (batch,), 0, num_entities)
    triplets = jnp.stack([heads, rels, tails], axis=1).astype(jnp.int32)  # [B, 3]

    ent_before = model.ent_emb    # safe: normalize no longer donates its input
    rel_table = model.rel_emb

    scores = model.forward(triplets, mode=None)
    scores = jax.block_until_ready(scores)

    # Reference check in plain JAX (pad columns are zero and cancel out).
    ent_ref = ent_before / jnp.linalg.norm(ent_before, axis=1, keepdims=True)
    h = jnp.take(ent_ref, triplets[:, 0], axis=0)
    r = jnp.take(rel_table, triplets[:, 1], axis=0)
    t = jnp.take(ent_ref, triplets[:, 2], axis=0)
    ref = -jnp.sqrt(jnp.sum((h + r - t) ** 2, axis=1))

    assert scores.shape == (batch,)
    assert jnp.allclose(scores, ref, atol=1e-4, rtol=1e-4), (scores, ref)

    print("KERNEL_OK")
</pallas_src>

<mosaic_0001>
module attributes {stable_mosaic.version = 11 : i64} {
  func.func @_normalize_kernel(%arg0: i32, %arg1: memref<64x128xf32, #tpu.memory_space<vmem>>, %arg2: memref<64x128xf32, #tpu.memory_space<vmem>>) attributes {dimension_semantics = [#tpu.dimension_semantics<parallel>], iteration_bounds = array<i64: 1>, scalar_prefetch = 0 : i64, scratch_operands = 0 : i64, tpu.core_type = #tpu.core_type<tc>, window_params = [{transform_indices = @transform_0, window_bounds = array<i64: 64, 128>}, {transform_indices = @transform_1, window_bounds = array<i64: 64, 128>}]} {
    %c0 = arith.constant 0 : index
    %c0_0 = arith.constant 0 : index
    %0 = vector.load %arg1[%c0, %c0_0] : memref<64x128xf32, #tpu.memory_space<vmem>>, vector<64x128xf32>
    %1 = arith.mulf %0, %0 : vector<64x128xf32>
    %cst = arith.constant dense<0.000000e+00> : vector<64xf32>
    %2 = vector.multi_reduction <add>, %1, %cst [1] : vector<64x128xf32> to vector<64xf32>
    %3 = vector.shape_cast %2 : vector<64xf32> to vector<64x1xf32>
    %cst_1 = arith.constant 1.000000e-30 : f32
    %4 = vector.broadcast %cst_1 : f32 to vector<64x1xf32>
    %5 = arith.addf %3, %4 : vector<64x1xf32>
    %6 = math.rsqrt %5 : vector<64x1xf32>
    %7 = vector.broadcast %6 : vector<64x1xf32> to vector<64x128xf32>
    %8 = arith.mulf %0, %7 : vector<64x128xf32>
    %c0_2 = arith.constant 0 : index
    %c0_3 = arith.constant 0 : index
    %9 = vector.load %arg2[%c0_2, %c0_3] : memref<64x128xf32, #tpu.memory_space<vmem>>, vector<64x128xf32>
    tpu.vector_store %arg2[%c0_2, %c0_3], %8 {strides = array<i32>} : memref<64x128xf32, #tpu.memory_space<vmem>>, vector<64x128xf32>,
    return
  }
  func.func @transform_0(%arg0: i32) -> (i32, i32) {
    %c0_i32 = arith.constant 0 : i32
    %c0_i32_0 = arith.constant 0 : i32
    return %arg0, %c0_i32 : i32, i32
  }
  func.func @transform_1(%arg0: i32) -> (i32, i32) {
    %c0_i32 = arith.constant 0 : i32
    %c0_i32_0 = arith.constant 0 : i32
    return %arg0, %c0_i32 : i32, i32
  }
}

</mosaic_0001>

<llo_original>
// kernel: tpu_custom_call.1
$region0: #{tpu_custom_call.1}
  #allocation0 [shape = 'u32[]', space=smem, size = 0x4, offset = 0x4, fixed_abs, tag = 'smem constant byte address 0x4 - core index']
  #allocation1 [shape = 'u32[144,128]{1,0:T(1,128)}', space=vmem, size = 0x12000, scoped, tag = 'internal scratch']
  %s0 = inlined_call_operand.hbm [shape: f32[64,128], index: 0, kind: input, shape index: {}]
  %s1 = inlined_call_operand.hbm [shape: f32[64,128], index: 1, kind: output, shape index: {}]
  %s2 = sld [smem:[#allocation0]]
  $region18: #{tpu_custom_call.1} parent=0
    _
  %s4 = ssub.s32 1, %s2
  %s5 = scalar_select 0, %s4, %s2
  $region1: #{tpu_custom_call.1} parent=0
    #allocation2 [shape = 'u8[32768]{0}', space=vmem, size = 0x8000, scoped, tag = 'input window, operand 0, single buffered']
    #allocation3 [shape = 's32[1]{0}', space=sflag, size = 0x4, scoped, tag = 'scoped memory for tpu_custom_call.1']
    #allocation4 [shape = 's32[1]{0}', space=sflag, size = 0x4, scoped, tag = 'scoped memory for tpu_custom_call.1']
    #allocation5 [shape = 'u8[32768]{0}', space=vmem, size = 0x8000, scoped, tag = 'output window, operand 0, single buffered']
    %6 = vsyncpa [#allocation3], 0
    %7 = vsyncpa [#allocation4], 0
    // Predicated region
    $region2: #{tpu_custom_call.1} parent=1 // pred_check
      _
    $region3: #{tpu_custom_call.1} parent=1 // pred_check_branch
      %9 = sbr.rel (0) target = $region5
    $region4: #{tpu_custom_call.1} parent=1 // pred_region
      %s11 = ssub.s32 1024, 1024
      %12 = vsyncadd [#allocation3], %s11
      %s13 = sshll.u32 [#allocation2], 4
      %s14 = int_to_ptr.vmem [resolvable:$true] %s13
      %19 = dma.hbm_to_vmem [thread:$0]  %s0, 1024, %s14, [#allocation3], 128, 128, 8
    $region5: #{tpu_custom_call.1} parent=1 // pred_fallthru
      _
    // Predicated region
    $region6: #{tpu_custom_call.1} parent=1 // pred_check
      _
    $region7: #{tpu_custom_call.1} parent=1 // pred_check_branch
      %21 = sbr.rel (0) target = $region9
    $region8: #{tpu_custom_call.1} parent=1 // pred_region
      %22 = dma.done [#allocation3], 1024
    $region9: #{tpu_custom_call.1} parent=1 // pred_fallthru
      _
    %v23 = vld [vmem:[#allocation2] sm:$0xff]
    %v24 = vld [vmem:[#allocation2 + $0x8] sm:$0xff]
    %v25 = vld [vmem:[#allocation2 + $0x10] sm:$0xff]
    %v26 = vld [vmem:[#allocation2 + $0x18] sm:$0xff]
    %v27 = vld [vmem:[#allocation2 + $0x20] sm:$0xff]
    %v28 = vld [vmem:[#allocation2 + $0x28] sm:$0xff]
    %v29 = vld [vmem:[#allocation2 + $0x30] sm:$0xff]
    %v30 = vld [vmem:[#allocation2 + $0x38] sm:$0xff]
    %v31 = vmul.f32 %v23, %v23
    %v32 = vmul.f32 %v24, %v24
    %v33 = vmul.f32 %v25, %v25
    %v34 = vmul.f32 %v26, %v26
    %v35 = vmul.f32 %v27, %v27
    %v36 = vmul.f32 %v28, %v28
    %v37 = vmul.f32 %v29, %v29
    %v38 = vmul.f32 %v30, %v30
    %39 = vadd.xlane.f32.xlu0 %v31
    %v40 = vpop.xlane.xlu0 %39
    %41 = vadd.xlane.f32.xlu0 %v32
    %v42 = vpop.xlane.xlu0 %41
    %43 = vadd.xlane.f32.xlu0 %v33
    %v44 = vpop.xlane.xlu0 %43
    %45 = vadd.xlane.f32.xlu0 %v34
    %v46 = vpop.xlane.xlu0 %45
    %47 = vadd.xlane.f32.xlu0 %v35
    %v48 = vpop.xlane.xlu0 %47
    %49 = vadd.xlane.f32.xlu0 %v36
    %v50 = vpop.xlane.xlu0 %49
    %51 = vadd.xlane.f32.xlu0 %v37
    %v52 = vpop.xlane.xlu0 %51
    %53 = vadd.xlane.f32.xlu0 %v38
    %v54 = vpop.xlane.xlu0 %53
    %v55 = vadd.f32 %v40, 1e-30
    %v56 = vadd.f32 %v42, 1e-30
    %v57 = vadd.f32 %v44, 1e-30
    %v58 = vadd.f32 %v46, 1e-30
    %v59 = vadd.f32 %v48, 1e-30
    %v60 = vadd.f32 %v50, 1e-30
    %v61 = vadd.f32 %v52, 1e-30
    %v62 = vadd.f32 %v54, 1e-30
    %v63 = vrsqrt.pop %v55
    %v64 = vrsqrt.pop %v56
    %v65 = vrsqrt.pop %v57
    %v66 = vrsqrt.pop %v58
    %v67 = vrsqrt.pop %v59
    %v68 = vrsqrt.pop %v60
    %v69 = vrsqrt.pop %v61
    %v70 = vrsqrt.pop %v62
    %v71 = vmul.f32 %v23, %v63
    %v72 = vmul.f32 %v24, %v64
    %v73 = vmul.f32 %v25, %v65
    %v74 = vmul.f32 %v26, %v66
    %v75 = vmul.f32 %v27, %v67
    %v76 = vmul.f32 %v28, %v68
    %v77 = vmul.f32 %v29, %v69
    %v78 = vmul.f32 %v30, %v70
    %79 = vst [vmem:[#allocation5] sm:$0xff] %v71
    %80 = vst [vmem:[#allocation5 + $0x8] sm:$0xff] %v72
    %81 = vst [vmem:[#allocation5 + $0x10] sm:$0xff] %v73
    %82 = vst [vmem:[#allocation5 + $0x18] sm:$0xff] %v74
    %83 = vst [vmem:[#allocation5 + $0x20] sm:$0xff] %v75
    %84 = vst [vmem:[#allocation5 + $0x28] sm:$0xff] %v76
    %85 = vst [vmem:[#allocation5 + $0x30] sm:$0xff] %v77
    %86 = vst [vmem:[#allocation5 + $0x38] sm:$0xff] %v78
    // Predicated region
    $region10: #{tpu_custom_call.1} parent=1 // pred_check
      _
    $region11: #{tpu_custom_call.1} parent=1 // pred_check_branch
      %88 = sbr.rel (0) target = $region13
    $region12: #{tpu_custom_call.1} parent=1 // pred_region
      %s90 = ssub.s32 1024, 1024
      %91 = vsyncadd [#allocation4], %s90
      %s92 = sshll.u32 [#allocation5], 4
      %s93 = int_to_ptr.vmem [resolvable:$true] %s92
      %98 = dma.vmem_to_hbm [thread:$0]  %s93, 1024, %s1, [#allocation4], 128, 128, 8
    $region13: #{tpu_custom_call.1} parent=1 // pred_fallthru
      _
    // Predicated region
    $region14: #{tpu_custom_call.1} parent=1 // pred_check
      _
    $region15: #{tpu_custom_call.1} parent=1 // pred_check_branch
      %100 = sbr.rel (0) target = $region17
    $region16: #{tpu_custom_call.1} parent=1 // pred_region
      %101 = dma.done [#allocation4], 1024
    $region17: #{tpu_custom_call.1} parent=1 // pred_fallthru
      _
    %102 = vsyncpa [#allocation3], 1
    %103 = vsyncpa [#allocation4], 1

</llo_original>
